<compile_context>
chip_gen: v7x
topology: tpu7x:2x2x1
jax: 0.10.0
libtpu: 0.0.40
codegen_flags: <defaults>
</compile_context>

<pallas_src>
import functools

import jax
import jax.numpy as jnp
from jax.experimental import pallas as pl
from jax.experimental.pallas import tpu as pltpu


def _round_up(x, m):
    return ((x + m - 1) // m) * m


def _fc_lrelu_kernel_resident(x_ref, w_ref, b_ref, o_ref, *, negative_slope):
    """f32 output: accumulate directly in the resident output tile (no scratch)."""
    k = pl.program_id(2)

    @pl.when(k == 0)
    def _():
        # Fold the bias add into the accumulator init.
        o_ref[...] = jnp.broadcast_to(b_ref[...].astype(jnp.float32), o_ref.shape)

    o_ref[...] += jnp.dot(x_ref[...], w_ref[...], preferred_element_type=jnp.float32)

    @pl.when(k == pl.num_programs(2) - 1)
    def _():
        acc = o_ref[...]
        o_ref[...] = jnp.where(acc >= 0, acc, negative_slope * acc)


def _fc_lrelu_kernel_scratch(x_ref, w_ref, b_ref, o_ref, acc_ref, *, negative_slope):
    """Narrow output dtypes: accumulate in an f32 VMEM scratch, cast in epilogue."""
    k = pl.program_id(2)

    @pl.when(k == 0)
    def _():
        acc_ref[...] = jnp.broadcast_to(b_ref[...].astype(jnp.float32), acc_ref.shape)

    acc_ref[...] += jnp.dot(x_ref[...], w_ref[...], preferred_element_type=jnp.float32)

    @pl.when(k == pl.num_programs(2) - 1)
    def _():
        acc = acc_ref[...]
        o_ref[...] = jnp.where(acc >= 0, acc, negative_slope * acc).astype(o_ref.dtype)


class FCLeakyReLU:
    """Fused y = LeakyReLU_0.2(x @ W^T + b) — Pallas TPU version of the PyTorch module.

    All one-time work (weight transpose, lane-dense padding of W^T and bias, tile
    selection) happens in __init__; __call__ only pads the activation if needed.
    """

    def __init__(self, weight, bias, *, negative_slope=0.2,
                 tm=256, tn=512, tk=512,
                 compute_dtype=None,
                 vmem_limit_bytes=48 * 1024 * 1024):
        out_dim, in_dim = weight.shape  # nn.Linear layout: (out_dim, in_dim)
        assert bias.shape == (out_dim,)
        self.in_dim, self.out_dim = in_dim, out_dim
        self.negative_slope = float(negative_slope)
        self.compute_dtype = compute_dtype
        self.vmem_limit_bytes = vmem_limit_bytes

        # ---- tile selection (lane dims multiples of 128, sublane multiples of 8) ----
        np_min = _round_up(out_dim, 128)
        kp_min = _round_up(in_dim, 128)
        tn = min(tn, np_min)
        tk = min(tk, kp_min)
        # Keep >= 2 blocks on the parallel N axis when the layer is wide enough, so
        # megacore sharding (v7x: 2 TCs) has work to split even when the M grid is 1.
        if np_min >= 256 and np_min <= tn:
            tn = max(128, ((np_min // 2) // 128) * 128)
        self.tm_max, self.tn, self.tk = tm, tn, tk
        self.Kp = _round_up(in_dim, tk)
        self.Np = _round_up(out_dim, tn)

        # ---- one-time parameter prep: transpose + pad + (optional) bf16 cast ----
        w_t = jnp.asarray(weight).T  # (in_dim, out_dim)
        if compute_dtype is not None:
            w_t = w_t.astype(compute_dtype)
        if (self.Kp, self.Np) != (in_dim, out_dim):
            w_t = jnp.pad(w_t, ((0, self.Kp - in_dim), (0, self.Np - out_dim)))
        b = jnp.asarray(bias).astype(jnp.float32)
        if self.Np != out_dim:
            b = jnp.pad(b, (0, self.Np - out_dim))
        self.w_t = w_t
        self.b = b.reshape(1, self.Np)

    def __call__(self, x):
        B, in_dim = x.shape
        assert in_dim == self.in_dim
        out_dtype = x.dtype

        tm = min(self.tm_max, _round_up(B, 8))
        Bp = _round_up(B, tm)
        tn, tk, Kp, Np = self.tn, self.tk, self.Kp, self.Np

        xk = x.astype(self.compute_dtype) if self.compute_dtype is not None else x
        if (Bp, Kp) != (B, in_dim):
            xk = jnp.pad(xk, ((0, Bp - B), (0, Kp - in_dim)))

        grid = (Bp // tm, Np // tn, Kp // tk)

        resident = jnp.dtype(out_dtype) == jnp.float32
        if resident:
            kernel = functools.partial(
                _fc_lrelu_kernel_resident, negative_slope=self.negative_slope)
            scratch = []
        else:
            kernel = functools.partial(
                _fc_lrelu_kernel_scratch, negative_slope=self.negative_slope)
            scratch = [pltpu.VMEM((tm, tn), jnp.float32)]

        cost = pl.CostEstimate(
            flops=2 * Bp * Kp * Np,
            transcendentals=0,
            bytes_accessed=(
                xk.size * xk.dtype.itemsize
                + self.w_t.size * self.w_t.dtype.itemsize
                + self.b.size * self.b.dtype.itemsize
                + Bp * Np * jnp.dtype(out_dtype).itemsize
            ),
        )

        out_p = pl.pallas_call(
            kernel,
            out_shape=jax.ShapeDtypeStruct((Bp, Np), out_dtype),
            grid_spec=pltpu.PrefetchScalarGridSpec(
                num_scalar_prefetch=0,
                grid=grid,
                in_specs=[
                    pl.BlockSpec((tm, tk), lambda i, j, k: (i, k)),   # x tile
                    pl.BlockSpec((tk, tn), lambda i, j, k: (k, j)),   # W^T tile
                    pl.BlockSpec((1, tn), lambda i, j, k: (0, j)),    # bias tile
                ],
                out_specs=pl.BlockSpec((tm, tn), lambda i, j, k: (i, j)),
                scratch_shapes=scratch,
            ),
            compiler_params=pltpu.CompilerParams(
                # M, N output tiles are independent (megacore-shardable);
                # K is the reduction axis, kept "arbitrary" and last.
                dimension_semantics=("parallel", "parallel", "arbitrary"),
                vmem_limit_bytes=self.vmem_limit_bytes,
            ),
            cost_estimate=cost,
        )(xk, self.w_t, self.b)

        if (Bp, Np) == (B, self.out_dim):
            return out_p
        # TODO(synk): downstream consumers could accept the padded (Bp, Np) layout to
        # skip this extra HBM pass; we slice to keep nn.Linear's exact output shape.
        return out_p[:B, :self.out_dim]


def _reference(x, weight, bias, slope=0.2):
    y = x @ weight.T + bias
    return jnp.where(y >= 0, y, slope * y)


if __name__ == "__main__":
    key = jax.random.PRNGKey(0)

    # ---- test 1: small FC layer (batch=8, in_dim=32, out_dim=64), f32 ----
    k_x, k_w, k_b, key = jax.random.split(key, 4)
    B, in_dim, out_dim = 8, 32, 64
    x = jax.random.normal(k_x, (B, in_dim), dtype=jnp.float32)
    bound = 1.0 / jnp.sqrt(jnp.float32(in_dim))
    weight = jax.random.uniform(k_w, (out_dim, in_dim), minval=-bound, maxval=bound,
                                dtype=jnp.float32)
    bias = jax.random.uniform(k_b, (out_dim,), minval=-bound, maxval=bound,
                              dtype=jnp.float32)
    layer = FCLeakyReLU(weight, bias)           # setup: transpose + pad once
    y = layer(x)
    jax.block_until_ready(y)
    assert y.shape == (B, out_dim)
    assert jnp.allclose(y, _reference(x, weight, bias), atol=1e-5, rtol=1e-5)

    # ---- test 2: larger layer exercising the multi-step K reduction and the
    # resident-output accumulator path (grid = (1, 2, 2)) ----
    k_x, k_w, k_b, key = jax.random.split(key, 4)
    B2, in2, out2 = 256, 1024, 512
    x2 = jax.random.normal(k_x, (B2, in2), dtype=jnp.float32)
    bound2 = 1.0 / jnp.sqrt(jnp.float32(in2))
    w2 = jax.random.uniform(k_w, (out2, in2), minval=-bound2, maxval=bound2,
                            dtype=jnp.float32)
    b2 = jax.random.uniform(k_b, (out2,), minval=-bound2, maxval=bound2,
                            dtype=jnp.float32)
    layer2 = FCLeakyReLU(w2, b2)
    y2 = layer2(x2)
    jax.block_until_ready(y2)
    assert y2.shape == (B2, out2)
    assert jnp.allclose(y2, _reference(x2, w2, b2), atol=1e-2, rtol=1e-2)

    # ---- test 3: optional bf16 compute path (f32 accumulate, f32 output) ----
    layer3 = FCLeakyReLU(w2, b2, compute_dtype=jnp.bfloat16)
    y3 = layer3(x2)
    jax.block_until_ready(y3)
    assert y3.shape == (B2, out2)
    assert jnp.allclose(y3, _reference(x2, w2, b2), atol=3e-2, rtol=3e-2)

    print("KERNEL_OK")
</pallas_src>

<mosaic_0001>
module attributes {stable_mosaic.version = 11 : i64} {
  func.func @_fc_lrelu_kernel_resident(%arg0: i32, %arg1: i32, %arg2: i32, %arg3: memref<8x128xf32, #tpu.memory_space<vmem>>, %arg4: memref<128x128xf32, #tpu.memory_space<vmem>>, %arg5: memref<1x128xf32, #tpu.memory_space<vmem>>, %arg6: memref<8x128xf32, #tpu.memory_space<vmem>>) attributes {dimension_semantics = [#tpu.dimension_semantics<parallel>, #tpu.dimension_semantics<parallel>, #tpu.dimension_semantics<arbitrary>], iteration_bounds = array<i64: 1, 1, 1>, scalar_prefetch = 0 : i64, scratch_operands = 0 : i64, tpu.core_type = #tpu.core_type<tc>, window_params = [{transform_indices = @transform_0, window_bounds = array<i64: 8, 128>}, {transform_indices = @transform_1, window_bounds = array<i64: 128, 128>}, {transform_indices = @transform_2, window_bounds = array<i64: 1, 128>}, {transform_indices = @transform_3, window_bounds = array<i64: 8, 128>}]} {
    %c0_i32 = arith.constant 0 : i32
    %0 = arith.cmpi eq, %arg2, %c0_i32 : i32
    %1 = arith.extui %0 : i1 to i32
    %c0_i32_0 = arith.constant 0 : i32
    %2 = arith.cmpi ne, %1, %c0_i32_0 : i32
    scf.if %2 {
      %c0_10 = arith.constant 0 : index
      %c0_11 = arith.constant 0 : index
      %12 = vector.load %arg5[%c0_10, %c0_11] : memref<1x128xf32, #tpu.memory_space<vmem>>, vector<1x128xf32>
      %13 = vector.shape_cast %12 : vector<1x128xf32> to vector<1x128xf32>
      %14 = vector.broadcast %13 : vector<1x128xf32> to vector<8x128xf32>
      %c0_12 = arith.constant 0 : index
      %c0_13 = arith.constant 0 : index
      %15 = vector.load %arg6[%c0_12, %c0_13] : memref<8x128xf32, #tpu.memory_space<vmem>>, vector<8x128xf32>
      tpu.vector_store %arg6[%c0_12, %c0_13], %14 {strides = array<i32>} : memref<8x128xf32, #tpu.memory_space<vmem>>, vector<8x128xf32>,
    } else {
    }
    %c0 = arith.constant 0 : index
    %c0_1 = arith.constant 0 : index
    %3 = vector.load %arg6[%c0, %c0_1] : memref<8x128xf32, #tpu.memory_space<vmem>>, vector<8x128xf32>
    %c0_2 = arith.constant 0 : index
    %c0_3 = arith.constant 0 : index
    %4 = vector.load %arg3[%c0_2, %c0_3] : memref<8x128xf32, #tpu.memory_space<vmem>>, vector<8x128xf32>
    %c0_4 = arith.constant 0 : index
    %c0_5 = arith.constant 0 : index
    %5 = vector.load %arg4[%c0_4, %c0_5] : memref<128x128xf32, #tpu.memory_space<vmem>>, vector<128x128xf32>
    %cst = arith.constant dense<0.000000e+00> : vector<8x128xf32>
    %6 = tpu.matmul %4, %5, %cst {dimension_numbers = #tpu.dot_dimension_numbers<[1], [0], [0], [1], [0, 0, 1, 1], [], []>} : vector<8x128xf32>, vector<128x128xf32>, vector<8x128xf32> -> vector<8x128xf32>
    %7 = arith.addf %3, %6 : vector<8x128xf32>
    %c0_6 = arith.constant 0 : index
    %c0_7 = arith.constant 0 : index
    %8 = vector.load %arg6[%c0_6, %c0_7] : memref<8x128xf32, #tpu.memory_space<vmem>>, vector<8x128xf32>
    tpu.vector_store %arg6[%c0_6, %c0_7], %7 {strides = array<i32>} : memref<8x128xf32, #tpu.memory_space<vmem>>, vector<8x128xf32>,
    %c0_i32_8 = arith.constant 0 : i32
    %9 = arith.cmpi eq, %arg2, %c0_i32_8 : i32
    %10 = arith.extui %9 : i1 to i32
    %c0_i32_9 = arith.constant 0 : i32
    %11 = arith.cmpi ne, %10, %c0_i32_9 : i32
    scf.if %11 {
      %c0_10 = arith.constant 0 : index
      %c0_11 = arith.constant 0 : index
      %12 = vector.load %arg6[%c0_10, %c0_11] : memref<8x128xf32, #tpu.memory_space<vmem>>, vector<8x128xf32>
      %cst_12 = arith.constant 0.000000e+00 : f32
      %13 = vector.broadcast %cst_12 : f32 to vector<8x128xf32>
      %14 = arith.cmpf oge, %12, %13 : vector<8x128xf32>
      %cst_13 = arith.constant 2.000000e-01 : f32
      %15 = vector.broadcast %cst_13 : f32 to vector<8x128xf32>
      %16 = arith.mulf %15, %12 : vector<8x128xf32>
      %17 = arith.select %14, %12, %16 : vector<8x128xi1>, vector<8x128xf32>
      %c0_14 = arith.constant 0 : index
      %c0_15 = arith.constant 0 : index
      %18 = vector.load %arg6[%c0_14, %c0_15] : memref<8x128xf32, #tpu.memory_space<vmem>>, vector<8x128xf32>
      tpu.vector_store %arg6[%c0_14, %c0_15], %17 {strides = array<i32>} : memref<8x128xf32, #tpu.memory_space<vmem>>, vector<8x128xf32>,
    } else {
    }
    return
  }
  func.func @transform_0(%arg0: i32, %arg1: i32, %arg2: i32) -> (i32, i32) {
    %c0_i32 = arith.constant 0 : i32
    return %arg0, %arg2 : i32, i32
  }
  func.func @transform_1(%arg0: i32, %arg1: i32, %arg2: i32) -> (i32, i32) {
    %c0_i32 = arith.constant 0 : i32
    return %arg2, %arg1 : i32, i32
  }
  func.func @transform_2(%arg0: i32, %arg1: i32, %arg2: i32) -> (i32, i32) {
    %c0_i32 = arith.constant 0 : i32
    %c0_i32_0 = arith.constant 0 : i32
    return %c0_i32, %arg1 : i32, i32
  }
  func.func @transform_3(%arg0: i32, %arg1: i32, %arg2: i32) -> (i32, i32) {
    %c0_i32 = arith.constant 0 : i32
    return %arg0, %arg1 : i32, i32
  }
}

</mosaic_0001>

<llo_original>
// kernel: tpu_custom_call.1
$region0: #{tpu_custom_call.1}
  #allocation0 [shape = 'u32[]', space=smem, size = 0x4, offset = 0x4, fixed_abs, tag = 'smem constant byte address 0x4 - core index']
  #allocation1 [shape = 'u32[144,128]{1,0:T(1,128)}', space=vmem, size = 0x12000, scoped, tag = 'internal scratch']
  %s0 = inlined_call_operand.hbm [shape: f32[8,128], index: 0, kind: input, shape index: {}]
  %s1 = inlined_call_operand.hbm [shape: f32[128,128], index: 1, kind: input, shape index: {}]
  %s2 = inlined_call_operand.vmem [shape: f32[1,128], index: 2, kind: input, shape index: {}]
  %s3 = inlined_call_operand.hbm [shape: f32[8,128], index: 3, kind: output, shape index: {}]
  %s4 = sld [smem:[#allocation0]]
  $region38: #{tpu_custom_call.1} parent=0
    _
  %s6 = ssub.s32 1, %s4
  %s7 = scalar_select 0, %s6, %s4
  $region1: #{tpu_custom_call.1} parent=0
    #allocation2 [shape = 'u8[4096]{0}', space=vmem, size = 0x1000, scoped, tag = 'input window, operand 0, single buffered']
    #allocation3 [shape = 's32[1]{0}', space=sflag, size = 0x4, scoped, tag = 'scoped memory for tpu_custom_call.1']
    #allocation4 [shape = 's32[1]{0}', space=sflag, size = 0x4, scoped, tag = 'scoped memory for tpu_custom_call.1']
    #allocation5 [shape = 'u8[65536]{0}', space=vmem, size = 0x10000, scoped, tag = 'input window, operand 1, single buffered']
    #allocation6 [shape = 's32[1]{0}', space=sflag, size = 0x4, scoped, tag = 'scoped memory for tpu_custom_call.1']
    #allocation7 [shape = 'u8[4096]{0}', space=vmem, size = 0x1000, scoped, tag = 'output window, operand 0, single buffered']
    %8 = vsyncpa [#allocation3], 0
    %9 = vsyncpa [#allocation6], 0
    %10 = vsyncpa [#allocation4], 0
    // Predicated region
    $region2: #{tpu_custom_call.1} parent=1 // pred_check
      _
    $region3: #{tpu_custom_call.1} parent=1 // pred_check_branch
      %12 = sbr.rel (0) target = $region5
    $region4: #{tpu_custom_call.1} parent=1 // pred_region
      %s14 = ssub.s32 128, 128
      %15 = vsyncadd [#allocation3], %s14
      %s17 = sshll.u32 [#allocation2], 4
      %s18 = int_to_ptr.vmem [resolvable:$true] %s17
      %20 = dma.hbm_to_vmem [thread:$0]  %s0, 128, %s18, [#allocation3]
    $region5: #{tpu_custom_call.1} parent=1 // pred_fallthru
      _
    // Predicated region
    $region6: #{tpu_custom_call.1} parent=1 // pred_check
      _
    $region7: #{tpu_custom_call.1} parent=1 // pred_check_branch
      %22 = sbr.rel (0) target = $region9
    $region8: #{tpu_custom_call.1} parent=1 // pred_region
      %s24 = ssub.s32 2048, 2048
      %25 = vsyncadd [#allocation6], %s24
      %s26 = sshll.u32 [#allocation5], 4
      %s27 = int_to_ptr.vmem [resolvable:$true] %s26
      %32 = dma.hbm_to_vmem [thread:$0]  %s1, 2048, %s27, [#allocation6], 128, 128, 8
    $region9: #{tpu_custom_call.1} parent=1 // pred_fallthru
      _
    // Predicated region
    $region10: #{tpu_custom_call.1} parent=1 // pred_check
      _
    $region11: #{tpu_custom_call.1} parent=1 // pred_check_branch
      %34 = sbr.rel (0) target = $region13
    $region12: #{tpu_custom_call.1} parent=1 // pred_region
      _
    $region13: #{tpu_custom_call.1} parent=1 // pred_fallthru
      _
    // Predicated region
    $region14: #{tpu_custom_call.1} parent=1 // pred_check
      _
    $region15: #{tpu_custom_call.1} parent=1 // pred_check_branch
      %36 = sbr.rel (0) target = $region17
    $region16: #{tpu_custom_call.1} parent=1 // pred_region
      %37 = dma.done [#allocation3], 128
    $region17: #{tpu_custom_call.1} parent=1 // pred_fallthru
      _
    // Predicated region
    $region18: #{tpu_custom_call.1} parent=1 // pred_check
      _
    $region19: #{tpu_custom_call.1} parent=1 // pred_check_branch
      %39 = sbr.rel (0) target = $region21
    $region20: #{tpu_custom_call.1} parent=1 // pred_region
      %40 = dma.done [#allocation6], 2048
    $region21: #{tpu_custom_call.1} parent=1 // pred_fallthru
      _
    %p41 = scmp.eq.s32.totalorder 0, 0
    // Predicated region
    $region22: #{tpu_custom_call.1} parent=1 // pred_check
      %p42 = pneg %p41
    $region23: #{tpu_custom_call.1} parent=1 // pred_check_branch
      %44 = sbr.rel (%p42) target = $region25
    $region24: #{tpu_custom_call.1} parent=1 // pred_region
      %v45 = vld [vmem:[%s2] sm:$0x1]
      %v47 = vlaneseq
      %v48 = vshrl.u32 %v47, 7
      %v49 = vsub.s32 0, %v48
      %v50 = vrot.slane %v45, %v49
      %52 = vst [vmem:[#allocation7] sm:$0xff] %v50
    $region25: #{tpu_custom_call.1} parent=1 // pred_fallthru
      _
    %v53 = vld [vmem:[#allocation7] sm:$0xff]
    %v54 = vld [vmem:[#allocation2] sm:$0xff]
    %v55 = vld [vmem:[#allocation5] sm:$0xff]
    %v56 = vld [vmem:[#allocation5 + $0x8] sm:$0xff]
    %v57 = vld [vmem:[#allocation5 + $0x10] sm:$0xff]
    %v58 = vld [vmem:[#allocation5 + $0x18] sm:$0xff]
    %v59 = vld [vmem:[#allocation5 + $0x20] sm:$0xff]
    %v60 = vld [vmem:[#allocation5 + $0x28] sm:$0xff]
    %v61 = vld [vmem:[#allocation5 + $0x30] sm:$0xff]
    %v62 = vld [vmem:[#allocation5 + $0x38] sm:$0xff]
    %v63 = vld [vmem:[#allocation5 + $0x40] sm:$0xff]
    %v64 = vld [vmem:[#allocation5 + $0x48] sm:$0xff]
    %v65 = vld [vmem:[#allocation5 + $0x50] sm:$0xff]
    %v66 = vld [vmem:[#allocation5 + $0x58] sm:$0xff]
    %v67 = vld [vmem:[#allocation5 + $0x60] sm:$0xff]
    %v68 = vld [vmem:[#allocation5 + $0x68] sm:$0xff]
    %v69 = vld [vmem:[#allocation5 + $0x70] sm:$0xff]
    %v70 = vld [vmem:[#allocation5 + $0x78] sm:$0xff]
    %71 = vmatprep.subr.mxu0 0.0
    %72 = vmatpush1.msra.mxu0 %v55
    %73 = vmatprep.subr.mxu0 0.0
    %74 = vmatpush1.msra.mxu0 %v56
    %75 = vmatprep.subr.mxu0 0.0
    %76 = vmatpush1.msra.mxu0 %v57
    %77 = vmatprep.subr.mxu0 0.0
    %78 = vmatpush1.msra.mxu0 %v58
    %79 = vmatprep.subr.mxu0 0.0
    %80 = vmatpush1.msra.mxu0 %v59
    %81 = vmatprep.subr.mxu0 0.0
    %82 = vmatpush1.msra.mxu0 %v60
    %83 = vmatprep.subr.mxu0 0.0
    %84 = vmatpush1.msra.mxu0 %v61
    %85 = vmatprep.subr.mxu0 0.0
    %86 = vmatpush1.msra.mxu0 %v62
    %87 = vmatprep.subr.mxu0 0.0
    %88 = vmatpush1.msra.mxu0 %v63
    %89 = vmatprep.subr.mxu0 0.0
    %90 = vmatpush1.msra.mxu0 %v64
    %91 = vmatprep.subr.mxu0 0.0
    %92 = vmatpush1.msra.mxu0 %v65
    %93 = vmatprep.subr.mxu0 0.0
    %94 = vmatpush1.msra.mxu0 %v66
    %95 = vmatprep.subr.mxu0 0.0
    %96 = vmatpush1.msra.mxu0 %v67
    %97 = vmatprep.subr.mxu0 0.0
    %98 = vmatpush1.msra.mxu0 %v68
    %99 = vmatprep.subr.mxu0 0.0
    %100 = vmatpush1.msra.mxu0 %v69
    %101 = vmatprep.subr.mxu0 0.0
    %102 = vmatpush1.msra.mxu0 %v70
    %103 = vmatprep.subr.mxu0 0.0
    %104 = vmatpush1.msra.mxu0 0.0
    %105 = vmatprep.subr.mxu0 0.0
    %106 = vmatpush1.msra.mxu0 0.0
    %107 = vmatprep.subr.mxu0 0.0
    %108 = vmatpush1.msra.mxu0 0.0
    %109 = vmatprep.subr.mxu0 0.0
    %110 = vmatpush1.msra.mxu0 0.0
    %111 = vmatprep.subr.mxu0 0.0
    %112 = vmatpush1.msra.mxu0 0.0
    %113 = vmatprep.subr.mxu0 0.0
    %114 = vmatpush1.msra.mxu0 0.0
    %115 = vmatprep.subr.mxu0 0.0
    %116 = vmatpush1.msra.mxu0 0.0
    %117 = vmatprep.subr.mxu0 0.0
    %118 = vmatpush1.msra.mxu0 0.0
    %119 = vmatprep.subr.mxu0 0.0
    %120 = vmatpush1.msra.mxu0 0.0
    %121 = vmatprep.subr.mxu0 0.0
    %122 = vmatpush1.msra.mxu0 0.0
    %123 = vmatprep.subr.mxu0 0.0
    %124 = vmatpush1.msra.mxu0 0.0
    %125 = vmatprep.subr.mxu0 0.0
    %126 = vmatpush1.msra.mxu0 0.0
    %127 = vmatprep.subr.mxu0 0.0
    %128 = vmatpush1.msra.mxu0 0.0
    %129 = vmatprep.subr.mxu0 0.0
    %130 = vmatpush1.msra.mxu0 0.0
    %131 = vmatprep.subr.mxu0 0.0
    %132 = vmatpush1.msra.mxu0 0.0
    %133 = vmatprep.subr.mxu0 0.0
    %134 = vmatpush1.msra.mxu0 0.0
    %135 = vmatprep.mubr.f32.mxu0 0.0
    %136 = vmatmul.mubr.f32.gmra.mrb[0].mxu0 %v54
    %v137 = vpop.f32.mrb[0].mxu0
    %v138 = vadd.f32 0.0, %v137
    %v139 = vpop.f32.mrb[0].mxu0
    %140 = vdwg.mxu0
    %v141 = vadd.f32 %v53, %v138
    %142 = vst [vmem:[#allocation7] sm:$0xff] %v141
    // Predicated region
    $region26: #{tpu_custom_call.1} parent=1 // pred_check
      %p143 = pneg %p41
    $region27: #{tpu_custom_call.1} parent=1 // pred_check_branch
      %145 = sbr.rel (%p143) target = $region29
    $region28: #{tpu_custom_call.1} parent=1 // pred_region
      %v146 = vld [vmem:[#allocation7] sm:$0xff]
      %vm147 = vcmp.ge.f32.partialorder %v146, 0.0
      %v148 = vmul.f32 %v146, 0.2
      %v149 = vsel %vm147, %v146, %v148
      %150 = vst [vmem:[#allocation7] sm:$0xff] %v149
    $region29: #{tpu_custom_call.1} parent=1 // pred_fallthru
      _
    // Predicated region
    $region30: #{tpu_custom_call.1} parent=1 // pred_check
      _
    $region31: #{tpu_custom_call.1} parent=1 // pred_check_branch
      %152 = sbr.rel (0) target = $region33
    $region32: #{tpu_custom_call.1} parent=1 // pred_region
      %s154 = ssub.s32 128, 128
      %155 = vsyncadd [#allocation4], %s154
      %s157 = sshll.u32 [#allocation7], 4
      %s158 = int_to_ptr.vmem [resolvable:$true] %s157
      %160 = dma.vmem_to_hbm [thread:$0]  %s158, 128, %s3, [#allocation4]
    $region33: #{tpu_custom_call.1} parent=1 // pred_fallthru
      _
    // Predicated region
    $region34: #{tpu_custom_call.1} parent=1 // pred_check
      _
    $region35: #{tpu_custom_call.1} parent=1 // pred_check_branch
      %162 = sbr.rel (0) target = $region37
    $region36: #{tpu_custom_call.1} parent=1 // pred_region
      %163 = dma.done [#allocation4], 128
    $region37: #{tpu_custom_call.1} parent=1 // pred_fallthru
      _
    %164 = vsyncpa [#allocation3], 1
    %165 = vsyncpa [#allocation6], 1
    %166 = vsyncpa [#allocation4], 1

</llo_original>
